<compile_context>
chip_gen: v7x
topology: tpu7x:2x2x1
jax: 0.10.0
libtpu: 0.0.40
codegen_flags: <defaults>
</compile_context>

<pallas_src>
import functools

import jax
import jax.numpy as jnp
from jax.experimental import pallas as pl
from jax.experimental.pallas import tpu as pltpu


def _round_up(x, m):
    return (x + m - 1) // m * m


# ---------------------------------------------------------------------------
# One-time probe: pin down the rotate direction of pltpu.roll on this backend
# so the conv taps can never be silently swapped.  Expected (and asserted by
# JAX's own tests): pltpu.roll == jnp.roll, i.e. out[i] = in[(i - shift) % N].
# ---------------------------------------------------------------------------
_ROLL_LIKE_JNP = None


def _roll_like_jnp():
    global _ROLL_LIKE_JNP
    if _ROLL_LIKE_JNP is None:
        def probe(x_ref, o_ref):
            o_ref[...] = pltpu.roll(x_ref[...], 1, 0)

        x = jnp.broadcast_to(jnp.arange(8, dtype=jnp.float32)[:, None], (8, 128))
        y = pl.pallas_call(
            probe, out_shape=jax.ShapeDtypeStruct((8, 128), jnp.float32))(x)
        _ROLL_LIKE_JNP = bool(y[1, 0] == 0.0)  # jnp.roll: out[1] == in[0] == 0
    return _ROLL_LIKE_JNP


# ---------------------------------------------------------------------------
# Pallas kernel: one grid step == one tile of Bt batch elements
# ---------------------------------------------------------------------------
def _cond_resblock_kernel(
    x_ref,     # [Bt, T, Cin_p]     bf16  channels-last input tile
    film_ref,  # [Bt, 2, Cout_p]    f32   FiLM (row 0 = scale, row 1 = bias)
    w1_ref,    # [3*Cin_p, Cout_p]  bf16  packed conv1 taps (x[t-1] | x[t] | x[t+1])
    w2_ref,    # [3*Cout_p, Cout_p] bf16  packed conv2 taps
    wr_ref,    # [Cin_p, Cout_p]    bf16  residual 1x1 conv
    vec_ref,   # [8, Cout_p]        f32   rows: b1,g1,be1,b2,g2,be2,br,0
    gmat_ref,  # [Cout_p, G]        f32   group indicator (pad channels = 0)
    gmt_ref,   # [G, Cout_p]        f32   its transpose
    y_ref,     # [Bt, T, Cout_p]    f32
    *,
    seq_len: int,
    batch_tile: int,
    inv_group_count: float,
    prev_shift: int,
    next_shift: int,
):
    T, Bt = seq_len, batch_tile
    M = Bt * T
    Cin = x_ref.shape[-1]
    C = y_ref.shape[-1]
    f32 = jnp.float32

    gmat = gmat_ref[...]
    gmat_t = gmt_ref[...]
    vec = vec_ref[...]
    film = film_ref[...]

    def mish(v):
        # mish(x) = x * tanh(softplus(x)) = x*(u^2+2u)/(u^2+2u+2), u = exp(x).
        # Single transcendental; for x > 20 the ratio is 1 to f32 precision.
        u = jnp.exp(jnp.minimum(v, 20.0))
        num = u * (u + 2.0)
        return v * jnp.where(v > 20.0, 1.0, num / (num + 2.0))

    def conv3(v32, w_ref, b):
        # v32: [M, Cw] f32, rows ordered batch-major / time-minor.
        # out[b,t] = v[b,t-1]@W0 + v[b,t]@W1 + v[b,t+1]@W2 + b  (zero padded).
        # Shifts run on the XLU via pltpu.roll along the flat row axis; rows
        # that would wrap across a batch boundary (t==0 for prev, t==T-1 for
        # next) are exactly the rows a zero-padded conv needs zeroed.
        Cw = v32.shape[-1]
        t = jax.lax.broadcasted_iota(jnp.int32, (Bt, T, Cw), 1).reshape(M, Cw)
        vp = jnp.where(t == 0, 0.0, pltpu.roll(v32, prev_shift, 0))
        vn = jnp.where(t == T - 1, 0.0, pltpu.roll(v32, next_shift, 0))
        cat = jnp.concatenate([vp, v32, vn], axis=-1).astype(jnp.bfloat16)
        return jnp.dot(cat, w_ref[...], preferred_element_type=f32) + b

    def gn_mish(h3, gamma, beta):
        # h3: [Bt, T, C] f32.  Per-(batch, group) statistics, two-pass
        # variance; group pooling/broadcast via tiny indicator matmuls.
        s = jnp.sum(h3, axis=1)                                      # [Bt, C]
        mean = jnp.dot(jnp.dot(s, gmat, preferred_element_type=f32)
                       * inv_group_count,
                       gmat_t, preferred_element_type=f32)           # [Bt, C]
        hc = h3 - mean[:, None, :]
        sq = jnp.sum(hc * hc, axis=1)                                # [Bt, C]
        var = jnp.dot(jnp.dot(sq, gmat, preferred_element_type=f32)
                      * inv_group_count,
                      gmat_t, preferred_element_type=f32)            # [Bt, C]
        inv = jax.lax.rsqrt(var + 1e-5)
        return mish(hc * (inv * gamma)[:, None, :] + beta)

    xb = x_ref[...].reshape(M, Cin)           # bf16
    x32 = xb.astype(f32)

    b1, g1, be1 = vec[0:1], vec[1:2], vec[2:3]
    b2, g2, be2 = vec[3:4], vec[4:5], vec[5:6]
    br = vec[6:7]

    # ---- blocks[0]: Conv1d(k=3, pad=1) -> GroupNorm -> Mish ----------------
    h = gn_mish(conv3(x32, w1_ref, b1).reshape(Bt, T, C), g1, be1)

    # ---- FiLM conditioning (cond encoder hoisted to the wrapper) -----------
    h = film[:, 0:1, :] * h + film[:, 1:2, :]

    # ---- blocks[1]: Conv1d(k=3, pad=1) -> GroupNorm -> Mish ----------------
    h = gn_mish(conv3(h.reshape(M, C), w2_ref, b2).reshape(Bt, T, C), g2, be2)

    # ---- residual 1x1 conv + add -------------------------------------------
    res = jnp.dot(xb, wr_ref[...], preferred_element_type=f32) + br
    y_ref[...] = h + res.reshape(Bt, T, C)


# ---------------------------------------------------------------------------
# Wrapper: layout, lane padding, batch tiling, packed operands, cond encoder
# ---------------------------------------------------------------------------
def conditional_res_block_1d(x_bct, cond_bc, params, *, num_groups=8,
                             cond_predict_scale=True):
    """x_bct: [B, Cin, T]; cond_bc: [B, cond_dim] -> [B, Cout, T]."""
    f32, bf16 = jnp.float32, jnp.bfloat16
    B, Cin, T = x_bct.shape
    Cout = params["w1"].shape[2]
    G = num_groups

    # lane padding: channels live on the 128-lane axis inside the kernel
    Cin_p = _round_up(Cin, 128)
    Cout_p = _round_up(Cout, 128)

    # batch tiling: fold Bt sequences per grid step -> matmul M = Bt*T rows
    Bt = max(1, min(B, pl.cdiv(256, T)))
    B_pad = pl.cdiv(B, Bt) * Bt

    # ---- hoisted cond_encoder: Mish -> Linear as one batched XLA matmul ----
    c = cond_bc.astype(f32)
    c = c * jnp.tanh(jax.nn.softplus(c))
    emb = jnp.dot(c, params["wl"].astype(f32),
                  precision=jax.lax.Precision.HIGHEST) + params["bl"].astype(f32)
    if cond_predict_scale:
        scale, bias = emb[:, :Cout], emb[:, Cout:]
    else:
        scale, bias = jnp.ones_like(emb), emb
    film = jnp.stack([scale, bias], axis=1)                       # [B, 2, Cout]
    film = jnp.pad(film, ((0, B_pad - B), (0, 0), (0, Cout_p - Cout))).astype(f32)

    # ---- channels-last bf16 input, lane/batch padded ------------------------
    x_btc = jnp.transpose(x_bct, (0, 2, 1))                       # [B, T, Cin]
    x_btc = jnp.pad(x_btc, ((0, B_pad - B), (0, 0), (0, Cin_p - Cin))).astype(bf16)

    # ---- packed conv weights: [3, Ci, Co] -> [3*Ci_p, Co_p] (tap-major) -----
    def pack_conv(w, ci, ci_p):
        w = jnp.pad(w, ((0, 0), (0, ci_p - ci), (0, Cout_p - Cout)))
        return w.reshape(3 * ci_p, Cout_p).astype(bf16)

    w1p = pack_conv(params["w1"], Cin, Cin_p)
    w2p = pack_conv(params["w2"], Cout, Cout_p)
    wrp = jnp.pad(params["wr"], ((0, Cin_p - Cin), (0, Cout_p - Cout))).astype(bf16)

    # ---- per-channel vectors packed into a single (8, Cout_p) tile ----------
    def padv(v):
        return jnp.pad(v.reshape(-1), (0, Cout_p - Cout))
    vec = jnp.stack([padv(params["b1"]), padv(params["g1"]), padv(params["be1"]),
                     padv(params["b2"]), padv(params["g2"]), padv(params["be2"]),
                     padv(params["br"]), jnp.zeros((Cout_p,), f32)], 0).astype(f32)

    # ---- group indicator matrices (zero rows/cols for pad channels) ---------
    gids = jnp.arange(Cout) // (Cout // G)
    gmat = (gids[:, None] == jnp.arange(G)[None, :]).astype(f32)
    gmat = jnp.pad(gmat, ((0, Cout_p - Cout), (0, 0)))            # [Cout_p, G]
    gmat_t = gmat.T                                               # [G, Cout_p]

    # roll direction self-check (prev = x[t-1], next = x[t+1])
    M = Bt * T
    like_jnp = _roll_like_jnp()
    prev_shift = 1 if like_jnp else M - 1
    next_shift = M - 1 if like_jnp else 1

    kernel = functools.partial(
        _cond_resblock_kernel,
        seq_len=T, batch_tile=Bt,
        inv_group_count=1.0 / float(T * (Cout // G)),
        prev_shift=prev_shift, next_shift=next_shift)

    def invariant(shape):
        return pl.BlockSpec(shape, lambda b, _n=len(shape): (0,) * _n)

    in_specs = [
        pl.BlockSpec((Bt, T, Cin_p), lambda b: (b, 0, 0)),        # x
        pl.BlockSpec((Bt, 2, Cout_p), lambda b: (b, 0, 0)),       # FiLM
        invariant((3 * Cin_p, Cout_p)),                           # w1 packed
        invariant((3 * Cout_p, Cout_p)),                          # w2 packed
        invariant((Cin_p, Cout_p)),                               # wr
        invariant((8, Cout_p)),                                   # packed vectors
        invariant((Cout_p, G)),                                   # gmat
        invariant((G, Cout_p)),                                   # gmat_t
    ]
    out_specs = pl.BlockSpec((Bt, T, Cout_p), lambda b: (b, 0, 0))

    flops = 2 * B * T * (3 * Cin + 3 * Cout + Cin) * Cout
    bytes_accessed = int(x_btc.size * 2 + film.size * 4
                         + (w1p.size + w2p.size + wrp.size) * 2
                         + (vec.size + 2 * gmat.size) * 4
                         + B_pad * T * Cout_p * 4)
    cost = pl.CostEstimate(flops=int(flops),
                           transcendentals=int(2 * B * T * Cout),
                           bytes_accessed=bytes_accessed)

    y_btc = pl.pallas_call(
        kernel,
        grid=(B_pad // Bt,),
        in_specs=in_specs,
        out_specs=out_specs,
        out_shape=jax.ShapeDtypeStruct((B_pad, T, Cout_p), jnp.float32),
        compiler_params=pltpu.CompilerParams(
            dimension_semantics=("parallel",),
            vmem_limit_bytes=64 * 1024 * 1024),
        cost_estimate=cost,
    )(x_btc, film, w1p, w2p, wrp, vec, gmat, gmat_t)

    # TODO(synk): when Cout >= 128 the [T,C]->[C,T] layout change could be done
    # in-kernel (XLU transpose) to drop this extra HBM pass of the output.
    return jnp.transpose(y_btc[:B, :, :Cout], (0, 2, 1))          # [B, Cout, T]


# ---------------------------------------------------------------------------
# Pure-JAX reference (mirrors the kernel's bf16 matmul-operand quantization)
# ---------------------------------------------------------------------------
def ref_forward(x, cond, p, num_groups, cond_predict_scale):
    f32 = jnp.float32

    def bf(a):  # same bf16 rounding of matmul operands as the kernel
        return a.astype(jnp.bfloat16).astype(f32)

    def mish(v):
        return v * jnp.tanh(jax.nn.softplus(v))

    def conv3(xx, w, b):  # xx [B,Ci,T], w [3,Ci,Co]
        wt = jnp.transpose(bf(w), (2, 1, 0))                      # [Co, Ci, 3]
        y = jax.lax.conv_general_dilated(
            bf(xx), wt, (1,), ((1, 1),), dimension_numbers=("NCH", "OIH", "NCH"))
        return y + b.reshape(1, -1, 1)

    def gn(h, gamma, beta):
        B, C, T = h.shape
        G = num_groups
        hg = h.reshape(B, G, C // G, T)
        m = hg.mean(axis=(2, 3), keepdims=True)
        v = hg.var(axis=(2, 3), keepdims=True)
        hn = ((hg - m) / jnp.sqrt(v + 1e-5)).reshape(B, C, T)
        return hn * gamma.reshape(1, -1, 1) + beta.reshape(1, -1, 1)

    C = p["w1"].shape[2]
    h = mish(gn(conv3(x, p["w1"], p["b1"]), p["g1"], p["be1"]))
    emb = jnp.dot(mish(cond), p["wl"],
                  precision=jax.lax.Precision.HIGHEST) + p["bl"]  # [B, cond_ch]
    if cond_predict_scale:
        scale = emb[:, :C].reshape(-1, C, 1)
        bias = emb[:, C:].reshape(-1, C, 1)
        h = scale * h + bias
    else:
        h = h + emb.reshape(-1, C, 1)
    h = mish(gn(conv3(h, p["w2"], p["b2"]), p["g2"], p["be2"]))
    res = jnp.einsum("bct,co->bot", bf(x), bf(p["wr"])) + p["br"].reshape(1, -1, 1)
    return h + res


# ---------------------------------------------------------------------------
if __name__ == "__main__":
    key = jax.random.PRNGKey(0)
    B, Cin, Cout, T, cond_dim, G = 2, 4, 16, 16, 32, 8
    cond_predict_scale = True
    cond_channels = 2 * Cout if cond_predict_scale else Cout

    ks = jax.random.split(key, 14)
    p = {
        "w1": 0.2 * jax.random.normal(ks[0], (3, Cin, Cout), jnp.float32),
        "b1": 0.1 * jax.random.normal(ks[1], (1, Cout), jnp.float32),
        "g1": 1.0 + 0.1 * jax.random.normal(ks[2], (1, Cout), jnp.float32),
        "be1": 0.1 * jax.random.normal(ks[3], (1, Cout), jnp.float32),
        "w2": 0.2 * jax.random.normal(ks[4], (3, Cout, Cout), jnp.float32),
        "b2": 0.1 * jax.random.normal(ks[5], (1, Cout), jnp.float32),
        "g2": 1.0 + 0.1 * jax.random.normal(ks[6], (1, Cout), jnp.float32),
        "be2": 0.1 * jax.random.normal(ks[7], (1, Cout), jnp.float32),
        "wl": 0.2 * jax.random.normal(ks[8], (cond_dim, cond_channels), jnp.float32),
        "bl": 0.1 * jax.random.normal(ks[9], (1, cond_channels), jnp.float32),
        "wr": 0.2 * jax.random.normal(ks[10], (Cin, Cout), jnp.float32),
        "br": 0.1 * jax.random.normal(ks[11], (1, Cout), jnp.float32),
    }
    x = jax.random.normal(ks[12], (B, Cin, T), jnp.float32)
    cond = jax.random.normal(ks[13], (B, cond_dim), jnp.float32)

    y = conditional_res_block_1d(x, cond, p, num_groups=G,
                                 cond_predict_scale=cond_predict_scale)
    jax.block_until_ready(y)

    y_ref = ref_forward(x, cond, p, G, cond_predict_scale)
    assert y.shape == (B, Cout, T)
    err = float(jnp.max(jnp.abs(y - y_ref)))
    assert jnp.allclose(y, y_ref, atol=1e-3, rtol=1e-3), (
        f"mismatch vs reference: max abs err {err}")
    print("KERNEL_OK")
</pallas_src>

<mosaic_0001>
module attributes {stable_mosaic.version = 11 : i64} {
  func.func @probe(%arg0: memref<8x128xf32, #tpu.memory_space<vmem>>, %arg1: memref<8x128xf32, #tpu.memory_space<vmem>>) attributes {dimension_semantics = [], scalar_prefetch = 0 : i64, scratch_operands = 0 : i64, tpu.core_type = #tpu.core_type<tc>} {
    %c0 = arith.constant 0 : index
    %c0_0 = arith.constant 0 : index
    %0 = vector.load %arg0[%c0, %c0_0] : memref<8x128xf32, #tpu.memory_space<vmem>>, vector<8x128xf32>
    %c1_i32 = arith.constant 1 : i32
    %1 = tpu.dynamic_rotate %0 by %c1_i32 dim 0 : vector<8x128xf32>, i32 -> vector<8x128xf32>
    %c0_1 = arith.constant 0 : index
    %c0_2 = arith.constant 0 : index
    %2 = vector.load %arg1[%c0_1, %c0_2] : memref<8x128xf32, #tpu.memory_space<vmem>>, vector<8x128xf32>
    tpu.vector_store %arg1[%c0_1, %c0_2], %1 {strides = array<i32>} : memref<8x128xf32, #tpu.memory_space<vmem>>, vector<8x128xf32>,
    return
  }
}

</mosaic_0001>

<llo_original>
// kernel: tpu_custom_call.1
$region0: #{tpu_custom_call.1}
  #allocation0 [shape = 'u32[]', space=smem, size = 0x4, offset = 0x4, fixed_abs, tag = 'smem constant byte address 0x4 - core index']
  #allocation1 [shape = 'u32[144,128]{1,0:T(1,128)}', space=vmem, size = 0x12000, scoped, tag = 'internal scratch']
  %s0 = inlined_call_operand.hbm [shape: f32[8,128], index: 0, kind: input, shape index: {}]
  %s1 = inlined_call_operand.hbm [shape: f32[8,128], index: 1, kind: output, shape index: {}]
  %s2 = sld [smem:[#allocation0]]
  $region18: #{tpu_custom_call.1} parent=0
    _
  %s4 = ssub.s32 1, %s2
  %s5 = scalar_select 0, %s4, %s2
  $region1: #{tpu_custom_call.1} parent=0
    #allocation2 [shape = 'u8[4096]{0}', space=vmem, size = 0x1000, scoped, tag = 'input window, operand 0, single buffered']
    #allocation3 [shape = 's32[1]{0}', space=sflag, size = 0x4, scoped, tag = 'scoped memory for tpu_custom_call.1']
    #allocation4 [shape = 's32[1]{0}', space=sflag, size = 0x4, scoped, tag = 'scoped memory for tpu_custom_call.1']
    #allocation5 [shape = 'u8[4096]{0}', space=vmem, size = 0x1000, scoped, tag = 'output window, operand 0, single buffered']
    %6 = vsyncpa [#allocation3], 0
    %7 = vsyncpa [#allocation4], 0
    // Predicated region
    $region2: #{tpu_custom_call.1} parent=1 // pred_check
      _
    $region3: #{tpu_custom_call.1} parent=1 // pred_check_branch
      %9 = sbr.rel (0) target = $region5
    $region4: #{tpu_custom_call.1} parent=1 // pred_region
      %s11 = ssub.s32 128, 128
      %12 = vsyncadd [#allocation3], %s11
      %s14 = sshll.u32 [#allocation2], 4
      %s15 = int_to_ptr.vmem [resolvable:$true] %s14
      %17 = dma.hbm_to_vmem [thread:$0]  %s0, 128, %s15, [#allocation3]
    $region5: #{tpu_custom_call.1} parent=1 // pred_fallthru
      _
    // Predicated region
    $region6: #{tpu_custom_call.1} parent=1 // pred_check
      _
    $region7: #{tpu_custom_call.1} parent=1 // pred_check_branch
      %19 = sbr.rel (0) target = $region9
    $region8: #{tpu_custom_call.1} parent=1 // pred_region
      %20 = dma.done [#allocation3], 128
    $region9: #{tpu_custom_call.1} parent=1 // pred_fallthru
      _
    %v21 = vld [vmem:[#allocation2] sm:$0xff]
    %v22 = vrot.slane %v21, 7
    %23 = vst [vmem:[#allocation5] sm:$0xff] %v22
    // Predicated region
    $region10: #{tpu_custom_call.1} parent=1 // pred_check
      _
    $region11: #{tpu_custom_call.1} parent=1 // pred_check_branch
      %25 = sbr.rel (0) target = $region13
    $region12: #{tpu_custom_call.1} parent=1 // pred_region
      %s27 = ssub.s32 128, 128
      %28 = vsyncadd [#allocation4], %s27
      %s30 = sshll.u32 [#allocation5], 4
      %s31 = int_to_ptr.vmem [resolvable:$true] %s30
      %33 = dma.vmem_to_hbm [thread:$0]  %s31, 128, %s1, [#allocation4]
    $region13: #{tpu_custom_call.1} parent=1 // pred_fallthru
      _
    // Predicated region
    $region14: #{tpu_custom_call.1} parent=1 // pred_check
      _
    $region15: #{tpu_custom_call.1} parent=1 // pred_check_branch
      %35 = sbr.rel (0) target = $region17
    $region16: #{tpu_custom_call.1} parent=1 // pred_region
      %36 = dma.done [#allocation4], 128
    $region17: #{tpu_custom_call.1} parent=1 // pred_fallthru
      _
    %37 = vsyncpa [#allocation3], 1
    %38 = vsyncpa [#allocation4], 1

</llo_original>
